<compile_context>
chip_gen: v6e
topology: v6e:2x2x1
jax: 0.10.0
libtpu: 0.0.40
codegen_flags: <defaults>
</compile_context>

<pallas_src>
import functools
import math

import jax
import jax.numpy as jnp
from jax.experimental import pallas as pl
from jax.experimental.pallas import tpu as pltpu

_LANES = 128


def _device_kind():
    try:
        return jax.devices()[0].device_kind.lower()
    except Exception:
        return ""


def _soft_iou_kernel(pred_ref, label_ref, out_ref, inter_acc, union_acc, *,
                     from_sigmoid, ignore_label, rows, block_rows, acc_rows,
                     num_chunks, needs_row_mask, single_select, compute_dtype):
    k = pl.program_id(1)

    pred = pred_ref[0].astype(compute_dtype)     # (block_rows, 128)
    label = label_ref[0].astype(compute_dtype)   # (block_rows, 128)
    if not from_sigmoid:
        pred = jax.nn.sigmoid(pred)              # EUP path (bf16 on v6e/v7x)

    zero = jnp.asarray(0, dtype=compute_dtype)
    ignore = jnp.asarray(ignore_label, dtype=compute_dtype)
    valid = label != ignore

    if needs_row_mask:
        # `rows` is a compile-time Python int; only the last (partial) chunk
        # actually has rows masked off, but the mask is cheap VALU filler.
        row_ids = jax.lax.broadcasted_iota(jnp.int32, (block_rows, _LANES), 0)
        row_ok = (row_ids + k * block_rows) < rows
    else:
        row_ok = None

    if single_select:
        # Exact when ignore_label <= 0: masked elements give
        #   inter = 0 * ignore_label = 0,  union = max(0, ignore_label) = 0.
        mask = valid
        if needs_row_mask:
            mask = jnp.logical_and(mask, row_ok)
            label = jnp.where(row_ok, label, zero)   # kill OOB-garbage rows
        pred_m = jnp.where(mask, pred, zero)
        inter = pred_m * label
        union = jnp.maximum(pred_m, label)
    else:
        mask = valid
        if needs_row_mask:
            mask = jnp.logical_and(mask, row_ok)
        inter = jnp.where(mask, pred * label, zero)
        union = jnp.where(mask, jnp.maximum(pred, label), zero)

    inter32 = inter.astype(jnp.float32)
    union32 = union.astype(jnp.float32)

    if num_chunks == 1:
        # Single chunk per sample: reduce directly, no persistent accumulator.
        inter_tot = jnp.sum(inter32)
        union_tot = jnp.sum(union32)
        out_ref[...] = (1.0 - inter_tot / (union_tot + 1e-8)).reshape(1, 1, 1)
    else:
        @pl.when(k == 0)
        def _():
            inter_acc[...] = jnp.zeros_like(inter_acc)
            union_acc[...] = jnp.zeros_like(union_acc)

        g = block_rows // acc_rows
        if g == 1:
            inter_acc[...] += inter32
            union_acc[...] += union32
        else:
            # Short f32 add tree over tile-aligned slabs -> plenty of ILP.
            inter_acc[...] += jnp.sum(
                inter32.reshape(g, acc_rows, _LANES), axis=0)
            union_acc[...] += jnp.sum(
                union32.reshape(g, acc_rows, _LANES), axis=0)

        @pl.when(k == pl.num_programs(1) - 1)
        def _():
            inter_tot = jnp.sum(inter_acc[...])      # single XLU reduce/sample
            union_tot = jnp.sum(union_acc[...])
            out_ref[...] = (1.0 - inter_tot / (union_tot + 1e-8)).reshape(1, 1, 1)


def soft_iou(pred, label, *, from_sigmoid=False, ignore_label=-1,
             _max_block_rows=None):
    """Pallas implementation of SoftIoU.forward. Returns shape (N,) float32."""
    N = pred.shape[0]
    L = math.prod(pred.shape[1:])

    label = label.reshape(pred.shape)          # torch: label.view(pred.size())
    pred_flat = pred.reshape(N, L)             # native dtype (no HBM upcast)
    label_flat = label.reshape(N, L)

    rows = pl.cdiv(L, _LANES)
    lane_pad = rows * _LANES - L
    if lane_pad:
        # Only the <=127-element lane remainder is ever padded; padded labels
        # get ignore_label so they are masked out in-kernel.
        pred_flat = jnp.pad(pred_flat, ((0, 0), (0, lane_pad)))
        label_flat = jnp.pad(label_flat, ((0, 0), (0, lane_pad)),
                             constant_values=ignore_label)

    pred3 = pred_flat.reshape(N, rows, _LANES)
    label3 = label_flat.reshape(N, rows, _LANES)

    kind = _device_kind()
    is_v5e = ("v5 lite" in kind) or ("v5e" in kind) or ("v5litepod" in kind)
    is_v6 = "v6" in kind
    is_v7 = "v7" in kind

    # bf16 elementwise stage only where the VPU/EUP have native bf16
    # (v6e/v7x); v5e / unknown chips stay on the validated f32 path.
    use_bf16 = (pred3.dtype == jnp.bfloat16 and label3.dtype == jnp.bfloat16
                and (is_v6 or is_v7) and not is_v5e)
    compute_dtype = jnp.bfloat16 if use_bf16 else jnp.float32

    # Dtype-scaled streaming blocks: ~8 MiB total pipeline buffers by default
    # (fits v5e's 16 MiB scoped VMEM), ~16 MiB on v6e.
    itemsize_sum = pred3.dtype.itemsize + label3.dtype.itemsize
    pipeline_bytes = (16 << 20) if is_v6 else (8 << 20)
    target_rows = max(
        512, (pipeline_bytes // (2 * _LANES * itemsize_sum)) // 512 * 512)
    block_limit = target_rows if _max_block_rows is None else _max_block_rows

    if rows <= block_limit:
        block_rows = rows            # full second-to-last dim: always legal
        num_chunks = 1
        needs_row_mask = False
    else:
        block_rows = block_limit
        num_chunks = pl.cdiv(rows, block_rows)
        needs_row_mask = (rows % block_rows) != 0

    # Wide f32 accumulators: largest power-of-two divisor of block_rows <= 512.
    acc_rows = block_rows
    for cand in (512, 256, 128, 64, 32, 16, 8):
        if block_rows % cand == 0:
            acc_rows = cand
            break

    kernel = functools.partial(
        _soft_iou_kernel,
        from_sigmoid=from_sigmoid,
        ignore_label=float(ignore_label),
        rows=rows,
        block_rows=block_rows,
        acc_rows=acc_rows,
        num_chunks=num_chunks,
        needs_row_mask=needs_row_mask,
        single_select=(ignore_label <= 0),
        compute_dtype=compute_dtype,
    )

    elems = N * rows * _LANES
    cost = pl.CostEstimate(
        flops=6 * elems,
        transcendentals=0 if from_sigmoid else elems,
        bytes_accessed=elems * itemsize_sum + N * 4,
    )

    vmem_need = (2 * block_rows * _LANES * itemsize_sum      # 2 bufs per input
                 + 2 * acc_rows * _LANES * 4)                # f32 accumulators
    vmem_limit = min(max(2 * vmem_need + (8 << 20), 24 << 20), 56 << 20)

    out = pl.pallas_call(
        kernel,
        out_shape=jax.ShapeDtypeStruct((N, 1, 1), jnp.float32),
        grid_spec=pltpu.PrefetchScalarGridSpec(
            num_scalar_prefetch=0,
            grid=(N, num_chunks),
            in_specs=[
                pl.BlockSpec((1, block_rows, _LANES), lambda i, k: (i, k, 0)),
                pl.BlockSpec((1, block_rows, _LANES), lambda i, k: (i, k, 0)),
            ],
            out_specs=pl.BlockSpec((1, 1, 1), lambda i, k: (i, 0, 0)),
            scratch_shapes=[
                pltpu.VMEM((acc_rows, _LANES), jnp.float32),  # intersection
                pltpu.VMEM((acc_rows, _LANES), jnp.float32),  # union
            ],
        ),
        compiler_params=pltpu.CompilerParams(
            dimension_semantics=("parallel", "arbitrary"),
            vmem_limit_bytes=vmem_limit,
        ),
        cost_estimate=cost,
    )(pred3, label3)

    return out[:, 0, 0]


def _soft_iou_ref(pred, label, *, from_sigmoid=False, ignore_label=-1):
    """Pure-JAX reference mirroring the PyTorch module."""
    label = label.reshape(pred.shape).astype(jnp.float32)
    pred = pred.astype(jnp.float32)
    w = (label != ignore_label).astype(jnp.float32)
    if not from_sigmoid:
        pred = jax.nn.sigmoid(pred)
    n = pred.shape[0]
    inter = jnp.sum((pred * label * w).reshape(n, -1), axis=1)
    union = jnp.sum((jnp.maximum(pred, label) * w).reshape(n, -1), axis=1)
    return 1.0 - inter / (union + 1e-8)


if __name__ == "__main__":
    key = jax.random.PRNGKey(0)
    k1, k2, k3, k4, k5, k6 = jax.random.split(key, 6)

    # Test 1: aligned f32 case (single chunk, no padding at all).
    N, C, H, W = 2, 4, 16, 16
    pred = jax.random.normal(k1, (N, C, H, W), dtype=jnp.float32)
    label = jax.random.randint(k2, (N, C, H, W), minval=-1, maxval=2).astype(
        jnp.float32)  # labels in {-1, 0, 1}; -1 is the ignore label

    loss = jax.block_until_ready(
        soft_iou(pred, label, from_sigmoid=False, ignore_label=-1))
    loss_ref = _soft_iou_ref(pred, label, from_sigmoid=False, ignore_label=-1)
    assert loss.shape == (N,), loss.shape
    assert jnp.allclose(loss, loss_ref, atol=1e-5, rtol=1e-5), (loss, loss_ref)

    # Test 2: unaligned spatial size, bf16 inputs, flat label (exercises view,
    # lane-remainder padding and the bf16 elementwise path on v6e/v7x).
    N2, C2, H2, W2 = 2, 1, 15, 15
    pred_b = jax.random.normal(k3, (N2, C2, H2, W2), dtype=jnp.bfloat16)
    label_b = jax.random.randint(k4, (N2, C2 * H2 * W2), minval=-1,
                                 maxval=2).astype(jnp.bfloat16)

    loss_b = jax.block_until_ready(
        soft_iou(pred_b, label_b, from_sigmoid=False, ignore_label=-1))
    loss_b_ref = _soft_iou_ref(pred_b, label_b, from_sigmoid=False,
                               ignore_label=-1)
    assert loss_b.shape == (N2,), loss_b.shape
    assert jnp.allclose(loss_b, loss_b_ref, atol=2e-2, rtol=2e-2), (
        loss_b, loss_b_ref)

    # Test 3: forced multi-chunk reduction with a partial last chunk
    # (exercises the accumulator lifecycle and the in-kernel row mask).
    N3, C3, H3, W3 = 2, 1, 40, 40
    pred_c = jax.random.normal(k5, (N3, C3, H3, W3), dtype=jnp.float32)
    label_c = jax.random.randint(k6, (N3, C3, H3, W3), minval=-1,
                                 maxval=2).astype(jnp.float32)
    loss_c = jax.block_until_ready(
        soft_iou(pred_c, label_c, from_sigmoid=False, ignore_label=-1,
                 _max_block_rows=8))
    loss_c_ref = _soft_iou_ref(pred_c, label_c, from_sigmoid=False,
                               ignore_label=-1)
    assert jnp.allclose(loss_c, loss_c_ref, atol=1e-5, rtol=1e-5), (
        loss_c, loss_c_ref)

    # Test 4: from_sigmoid=True path (no in-kernel sigmoid).
    pred_s = jax.nn.sigmoid(pred)
    loss_s = jax.block_until_ready(
        soft_iou(pred_s, label, from_sigmoid=True, ignore_label=-1))
    loss_s_ref = _soft_iou_ref(pred_s, label, from_sigmoid=True,
                               ignore_label=-1)
    assert jnp.allclose(loss_s, loss_s_ref, atol=1e-5, rtol=1e-5), (
        loss_s, loss_s_ref)

    # Test 5: positive ignore_label (general two-select masking path).
    label_p = jax.random.randint(k2, (N, C, H, W), minval=0, maxval=3).astype(
        jnp.float32)  # labels in {0, 1, 2}; ignore 2
    loss_p = jax.block_until_ready(
        soft_iou(pred, label_p, from_sigmoid=False, ignore_label=2))
    loss_p_ref = _soft_iou_ref(pred, label_p, from_sigmoid=False,
                               ignore_label=2)
    assert jnp.allclose(loss_p, loss_p_ref, atol=1e-5, rtol=1e-5), (
        loss_p, loss_p_ref)

    print("KERNEL_OK")
</pallas_src>

<mosaic_0001>
module attributes {stable_mosaic.version = 11 : i64} {
  func.func @_soft_iou_kernel(%arg0: i32, %arg1: i32, %arg2: memref<1x8x128xf32, #tpu.memory_space<vmem>>, %arg3: memref<1x8x128xf32, #tpu.memory_space<vmem>>, %arg4: memref<1x1x1xf32, #tpu.memory_space<vmem>>, %arg5: memref<8x128xf32, #tpu.memory_space<vmem>>, %arg6: memref<8x128xf32, #tpu.memory_space<vmem>>) attributes {dimension_semantics = [#tpu.dimension_semantics<parallel>, #tpu.dimension_semantics<arbitrary>], iteration_bounds = array<i64: 2, 1>, scalar_prefetch = 0 : i64, scratch_operands = 2 : i64, tpu.core_type = #tpu.core_type<tc>, window_params = [{transform_indices = @transform_0, window_bounds = array<i64: 1, 8, 128>}, {transform_indices = @transform_1, window_bounds = array<i64: 1, 8, 128>}, {transform_indices = @transform_2, window_bounds = array<i64: 1, 1, 1>}]} {
    %c0 = arith.constant 0 : index
    %c0_0 = arith.constant 0 : index
    %c0_1 = arith.constant 0 : index
    %0 = vector.load %arg2[%c0, %c0_0, %c0_1] : memref<1x8x128xf32, #tpu.memory_space<vmem>>, vector<1x8x128xf32>
    %1 = vector.shape_cast %0 : vector<1x8x128xf32> to vector<8x128xf32>
    %c0_2 = arith.constant 0 : index
    %c0_3 = arith.constant 0 : index
    %c0_4 = arith.constant 0 : index
    %2 = vector.load %arg3[%c0_2, %c0_3, %c0_4] : memref<1x8x128xf32, #tpu.memory_space<vmem>>, vector<1x8x128xf32>
    %3 = vector.shape_cast %2 : vector<1x8x128xf32> to vector<8x128xf32>
    %4 = arith.negf %1 : vector<8x128xf32>
    %5 = math.exp %4 : vector<8x128xf32>
    %cst = arith.constant 1.000000e+00 : f32
    %6 = vector.broadcast %cst : f32 to vector<8x128xf32>
    %7 = arith.addf %6, %5 : vector<8x128xf32>
    %8 = arith.divf %6, %7 : vector<8x128xf32>
    %cst_5 = arith.constant -1.000000e+00 : f32
    %9 = vector.broadcast %cst_5 : f32 to vector<8x128xf32>
    %10 = arith.cmpf one, %3, %9 : vector<8x128xf32>
    %cst_6 = arith.constant 0.000000e+00 : f32
    %11 = vector.broadcast %cst_6 : f32 to vector<8x128xf32>
    %12 = arith.select %10, %8, %11 : vector<8x128xi1>, vector<8x128xf32>
    %13 = arith.mulf %12, %3 : vector<8x128xf32>
    %14 = arith.maximumf %12, %3 : vector<8x128xf32>
    %15 = vector.shape_cast %13 : vector<8x128xf32> to vector<1x8x128xf32>
    %cst_7 = arith.constant dense<0.000000e+00> : vector<1xf32>
    %16 = vector.multi_reduction <add>, %15, %cst_7 [1, 2] : vector<1x8x128xf32> to vector<1xf32>
    %17 = vector.shape_cast %16 : vector<1xf32> to vector<1x1x1xf32>
    %18 = vector.extract %17[0, 0, 0] : f32 from vector<1x1x1xf32>
    %19 = vector.shape_cast %14 : vector<8x128xf32> to vector<1x8x128xf32>
    %cst_8 = arith.constant dense<0.000000e+00> : vector<1xf32>
    %20 = vector.multi_reduction <add>, %19, %cst_8 [1, 2] : vector<1x8x128xf32> to vector<1xf32>
    %21 = vector.shape_cast %20 : vector<1xf32> to vector<1x1x1xf32>
    %22 = vector.extract %21[0, 0, 0] : f32 from vector<1x1x1xf32>
    %cst_9 = arith.constant 9.99999993E-9 : f32
    %23 = arith.addf %22, %cst_9 : f32
    %24 = arith.divf %18, %23 : f32
    %cst_10 = arith.constant 1.000000e+00 : f32
    %25 = arith.subf %cst_10, %24 : f32
    %26 = vector.broadcast %25 : f32 to vector<1x1x1xf32>
    %c0_11 = arith.constant 0 : index
    %c0_12 = arith.constant 0 : index
    %c0_13 = arith.constant 0 : index
    %27 = vector.load %arg4[%c0_11, %c0_12, %c0_13] : memref<1x1x1xf32, #tpu.memory_space<vmem>>, vector<1x1x1xf32>
    tpu.vector_store %arg4[%c0_11, %c0_12, %c0_13], %26 {strides = array<i32>} : memref<1x1x1xf32, #tpu.memory_space<vmem>>, vector<1x1x1xf32>,
    return
  }
  func.func @transform_0(%arg0: i32, %arg1: i32) -> (i32, i32, i32) {
    %c0_i32 = arith.constant 0 : i32
    %c0_i32_0 = arith.constant 0 : i32
    return %arg0, %arg1, %c0_i32 : i32, i32, i32
  }
  func.func @transform_1(%arg0: i32, %arg1: i32) -> (i32, i32, i32) {
    %c0_i32 = arith.constant 0 : i32
    %c0_i32_0 = arith.constant 0 : i32
    return %arg0, %arg1, %c0_i32 : i32, i32, i32
  }
  func.func @transform_2(%arg0: i32, %arg1: i32) -> (i32, i32, i32) {
    %c0_i32 = arith.constant 0 : i32
    %c0_i32_0 = arith.constant 0 : i32
    %c0_i32_1 = arith.constant 0 : i32
    return %arg0, %c0_i32, %c0_i32_0 : i32, i32, i32
  }
}

</mosaic_0001>

<llo_original>
// kernel: tpu_custom_call.1
$region0: #{tpu_custom_call.1}
  #allocation0 [shape = 'u32[]', space=smem, size = 0x4, offset = 0x4, fixed_abs, tag = 'smem constant byte address 0x4 - core index']
  #allocation1 [shape = 'u32[144,128]{1,0:T(1,128)}', space=vmem, size = 0x12000, scoped, tag = 'internal scratch']
  #allocation2 [shape = 'f32[8,128]{1,0:T(8,128)}', space=vmem, size = 0x1000, scoped, tag = 'scratch operand']
  #allocation3 [shape = 'f32[8,128]{1,0:T(8,128)}', space=vmem, size = 0x1000, scoped, tag = 'scratch operand']
  %s0 = inlined_call_operand.hbm [shape: f32[2,8,128], index: 0, kind: input, shape index: {}]
  %s1 = inlined_call_operand.hbm [shape: f32[2,8,128], index: 1, kind: input, shape index: {}]
  %s2 = inlined_call_operand.vmem [shape: f32[2,1,1], index: 2, kind: output, shape index: {}]
  %s3 = sld [smem:[#allocation0]]
  $region49: #{tpu_custom_call.1} parent=0
    _
  %s5 = ssub.s32 1, %s3
  %s6 = scalar_select 0, %s5, %s3
  $region1: #{tpu_custom_call.1} parent=0
    #allocation4 [shape = 'u8[8192]{0}', space=vmem, size = 0x2000, scoped, tag = 'input window, operand 0']
    #allocation5 [shape = 's32[2]{0}', space=sflag, size = 0x8, scoped, tag = 'scoped memory for tpu_custom_call.1']
    #allocation6 [shape = 'u8[8192]{0}', space=vmem, size = 0x2000, scoped, tag = 'input window, operand 1']
    #allocation7 [shape = 's32[2]{0}', space=sflag, size = 0x8, scoped, tag = 'scoped memory for tpu_custom_call.1']
    %7 = vsyncpa [#allocation5], 0
    %s8 = scalar_lea.sflag [#allocation5], 1
    %9 = vsyncpa %s8, 0
    %10 = vsyncpa [#allocation7], 0
    %s11 = scalar_lea.sflag [#allocation7], 1
    %12 = vsyncpa %s11, 0
    loop: start=0, step=1, limit=4
    $region2: #{tpu_custom_call.1} parent=1 // loop_pre_header
      _
    $region3: #{tpu_custom_call.1} parent=1 // loop_header
      %s14 = sphi 0, %s18
      %p15 = scmp.ge.s32.totalorder %s14, 4
      %s21 = sphi 0, %s33
      %s22 = sphi 0, %s29
      %s23 = sphi 0, %s21
      %s24 = sphi 0, %s22
      %s25 = sphi 0, %s23
      %s26 = sphi 0, %s24
      %s38 = sphi 0, %s40
      %s41 = sphi 0, %s38
      %s42 = sphi 0, %s41
      %s58 = sphi 0, %s42
      %s66 = sphi 0, %s68
      %s69 = sphi 0, %s66
      %s70 = sphi 0, %s69
      %s86 = sphi 0, %s70
      %s92 = sphi 0, %s94
      %s95 = sphi 0, %s92
      %s96 = sphi 0, %s95
      %s112 = sphi 0, %s96
    $region4: #{tpu_custom_call.1} parent=1 // loop_header_branch
      %17 = sbr.rel (%p15) target = $region8
    $region5: #{tpu_custom_call.1} parent=1 // loop_body
      %s19 = ssub.s32 %s14, 1
      %s20 = ssub.s32 %s14, 2
      %s27 = sadd.s32 1, %s22
      %p28 = scmp.ge.s32.totalorder %s27, 1
      %s29 = scalar_select %p28, 0, %s27
      %s30 = sadd.s32 1, %s21
      %s31 = scalar_select %p28, %s30, %s21
      %p32 = scmp.ge.s32.totalorder %s31, 2
      %s33 = scalar_select %p32, 0, %s31
      %s34 = ssub.s32 %s21, %s33
      %s35 = ssub.s32 %s22, %s29
      %s36 = sor.u32 %s34, %s35
      %p37 = scmp.eq.s32.totalorder %s36, 0
      %s39 = sadd.s32 %s38, 1
      %s40 = scalar_select %p37, %s38, %s39
      %p43 = pneg %p37
      %p44 = scmp.eq.s32.totalorder %s14, 1
      %p45 = por %p43, %p44
      %p46 = scmp.ne.s32.totalorder %s38, %s41
      %p47 = scmp.eq.s32.totalorder %s14, 0
      %p48 = por %p46, %p47
      %p49 = scmp.ne.s32.totalorder %s38, %s41
      %p50 = scmp.eq.s32.totalorder %s19, 1
      %p51 = por %p49, %p50
      %p52 = scmp.ne.s32.totalorder %s41, %s42
      %p53 = scmp.eq.s32.totalorder %s19, 0
      %p54 = por %p52, %p53
      %p55 = scmp.ne.s32.totalorder %s41, %s42
      %p56 = scmp.eq.s32.totalorder %s20, 1
      %p57 = por %p55, %p56
      %p59 = scmp.ne.s32.totalorder %s42, %s58
      %p60 = scmp.eq.s32.totalorder %s20, 0
      %p61 = por %p59, %p60
      %s62 = ssub.s32 %s21, %s33
      %s63 = ssub.s32 %s22, %s29
      %s64 = sor.u32 %s62, %s63
      %p65 = scmp.eq.s32.totalorder %s64, 0
      %s67 = sadd.s32 %s66, 1
      %s68 = scalar_select %p65, %s66, %s67
      %p71 = pneg %p65
      %p72 = scmp.eq.s32.totalorder %s14, 1
      %p73 = por %p71, %p72
      %p74 = scmp.ne.s32.totalorder %s66, %s69
      %p75 = scmp.eq.s32.totalorder %s14, 0
      %p76 = por %p74, %p75
      %p77 = scmp.ne.s32.totalorder %s66, %s69
      %p78 = scmp.eq.s32.totalorder %s19, 1
      %p79 = por %p77, %p78
      %p80 = scmp.ne.s32.totalorder %s69, %s70
      %p81 = scmp.eq.s32.totalorder %s19, 0
      %p82 = por %p80, %p81
      %p83 = scmp.ne.s32.totalorder %s69, %s70
      %p84 = scmp.eq.s32.totalorder %s20, 1
      %p85 = por %p83, %p84
      %p87 = scmp.ne.s32.totalorder %s70, %s86
      %p88 = scmp.eq.s32.totalorder %s20, 0
      %p89 = por %p87, %p88
      %s90 = ssub.s32 %s21, %s33
      %p91 = scmp.eq.s32.totalorder %s90, 0
      %s93 = sadd.s32 %s92, 1
      %s94 = scalar_select %p91, %s92, %s93
      %p97 = pneg %p91
      %p98 = scmp.eq.s32.totalorder %s14, 1
      %p99 = por %p97, %p98
      %p100 = scmp.ne.s32.totalorder %s92, %s95
      %p101 = scmp.eq.s32.totalorder %s14, 0
      %p102 = por %p100, %p101
      %p103 = scmp.ne.s32.totalorder %s92, %s95
      %p104 = scmp.eq.s32.totalorder %s19, 1
      %p105 = por %p103, %p104
      %p106 = scmp.ne.s32.totalorder %s95, %s96
      %p107 = scmp.eq.s32.totalorder %s19, 0
      %p108 = por %p106, %p107
      %p109 = scmp.ne.s32.totalorder %s95, %s96
      %p110 = scmp.eq.s32.totalorder %s20, 1
      %p111 = por %p109, %p110
      %p113 = scmp.ne.s32.totalorder %s96, %s112
      %p114 = scmp.eq.s32.totalorder %s20, 0
      %p115 = por %p113, %p114
      %p116 = scmp.le.s32.totalorder 1, %s14
      %p117 = scmp.lt.s32.totalorder %s14, 3
      %p118 = pnand %p116, %p117
      %p119 = pneg %p118
      // Predicated region
      $region9: #{tpu_custom_call.1} parent=5 // pred_check
        _
      $region10: #{tpu_custom_call.1} parent=5 // pred_check_branch
        %121 = sbr.rel (%p118) target = $region12
      $region11: #{tpu_custom_call.1} parent=5 // pred_region
        %s122 = ssub.s32 %s14, 1
      $region12: #{tpu_custom_call.1} parent=5 // pred_fallthru
        _
      %p123 = scmp.lt.s32.totalorder %s14, 2
      // Predicated region
      $region13: #{tpu_custom_call.1} parent=5 // pred_check
        %p124 = pneg %p123
      $region14: #{tpu_custom_call.1} parent=5 // pred_check_branch
        %126 = sbr.rel (%p124) target = $region16
      $region15: #{tpu_custom_call.1} parent=5 // pred_region
        // Predicated region
        $region17: #{tpu_custom_call.1} parent=15 // pred_check
          %p127 = pneg %p48
        $region18: #{tpu_custom_call.1} parent=15 // pred_check_branch
          %129 = sbr.rel (%p127) target = $region20
        $region19: #{tpu_custom_call.1} parent=15 // pred_region
          %s130 = sand.u32 %s38, 1
          %s131 = scalar_lea.sflag [#allocation5], %s130
          %s132 = sand.u32 %s38, 1
          %s133 = smul.addr %s132, 8
          %s134 = scalar_lea.vmem [#allocation4], %s133
          %s136 = ssub.s32 128, 128
          %137 = vsyncadd %s131, %s136
          %s138 = sadd.s32 %s22, %s21
          %s139 = smul.addr %s138, 128
          %s140 = scalar_lea.hbm %s0, %s139
          %s142 = sshll.u32 %s134, 4
          %s143 = int_to_ptr.vmem [resolvable:$true] %s142
          %145 = dma.hbm_to_vmem [thread:$0]  %s140, 128, %s143, %s131
        $region20: #{tpu_custom_call.1} parent=15 // pred_fallthru
          _
        // Predicated region
        $region21: #{tpu_custom_call.1} parent=15 // pred_check
          %p146 = pneg %p76
        $region22: #{tpu_custom_call.1} parent=15 // pred_check_branch
          %148 = sbr.rel (%p146) target = $region24
        $region23: #{tpu_custom_call.1} parent=15 // pred_region
          %s149 = sand.u32 %s66, 1
          %s150 = scalar_lea.sflag [#allocation7], %s149
          %s151 = sand.u32 %s66, 1
          %s152 = smul.addr %s151, 8
          %s153 = scalar_lea.vmem [#allocation6], %s152
          %s155 = ssub.s32 128, 128
          %156 = vsyncadd %s150, %s155
          %s157 = sadd.s32 %s22, %s21
          %s158 = smul.addr %s157, 128
          %s159 = scalar_lea.hbm %s1, %s158
          %s161 = sshll.u32 %s153, 4
          %s162 = int_to_ptr.vmem [resolvable:$true] %s161
          %164 = dma.hbm_to_vmem [thread:$0]  %s159, 128, %s162, %s150
        $region24: #{tpu_custom_call.1} parent=15 // pred_fallthru
          _
      $region16: #{tpu_custom_call.1} parent=5 // pred_fallthru
        _
      %p165 = scmp.le.s32.totalorder 1, %s14
      %p166 = scmp.lt.s32.totalorder %s14, 3
      %p167 = pnand %p165, %p166
      %p168 = pneg %p167
      // Predicated region
      $region25: #{tpu_custom_call.1} parent=5 // pred_check
        _
      $region26: #{tpu_custom_call.1} parent=5 // pred_check_branch
        %170 = sbr.rel (%p167) target = $region28
      $region27: #{tpu_custom_call.1} parent=5 // pred_region
        %s171 = ssub.s32 %s14, 1
        %s172 = sand.u32 %s41, 1
        %s173 = scalar_lea.sflag [#allocation5], %s172
        %s174 = sand.u32 %s41, 1
        %s175 = smul.addr %s174, 8
        %s176 = scalar_lea.vmem [#allocation4], %s175
        // Predicated region
        $region29: #{tpu_custom_call.1} parent=27 // pred_check
          %p177 = pneg %p54
        $region30: #{tpu_custom_call.1} parent=27 // pred_check_branch
          %179 = sbr.rel (%p177) target = $region32
        $region31: #{tpu_custom_call.1} parent=27 // pred_region
          %180 = dma.done %s173, 128
        $region32: #{tpu_custom_call.1} parent=27 // pred_fallthru
          _
        %s181 = sand.u32 %s69, 1
        %s182 = scalar_lea.sflag [#allocation7], %s181
        %s183 = sand.u32 %s69, 1
        %s184 = smul.addr %s183, 8
        %s185 = scalar_lea.vmem [#allocation6], %s184
        // Predicated region
        $region33: #{tpu_custom_call.1} parent=27 // pred_check
          %p186 = pneg %p82
        $region34: #{tpu_custom_call.1} parent=27 // pred_check_branch
          %188 = sbr.rel (%p186) target = $region36
        $region35: #{tpu_custom_call.1} parent=27 // pred_region
          %189 = dma.done %s182, 128
        $region36: #{tpu_custom_call.1} parent=27 // pred_fallthru
          _
        %s190 = sand.u32 %s41, 1
        %s191 = scalar_lea.sflag [#allocation5], %s190
        %s192 = sand.u32 %s41, 1
        %s193 = smul.addr %s192, 8
        %s194 = scalar_lea.vmem [#allocation4], %s193
        %p195 = pneg %p54
        %p196 = pneg %p51
        %s197 = sand.u32 %s69, 1
        %s198 = scalar_lea.sflag [#allocation7], %s197
        %s199 = sand.u32 %s69, 1
        %s200 = smul.addr %s199, 8
        %s201 = scalar_lea.vmem [#allocation6], %s200
        %p202 = pneg %p82
        %p203 = pneg %p79
        %p204 = pneg %p108
        %p205 = pneg %p105
        %p206 = scmp.lt.s32.totalorder %s23, 1
        %s207 = scalar_select %p206, %s23, 1
        %s208 = scalar_lea.vmem %s2, %s207
        %p209 = scmp.lt.s32.totalorder %s23, 1
        %s210 = scalar_select %p209, %s23, 1
        %s211 = scalar_lea.vmem %s2, %s210
        %v212 = vld [vmem:[%s176] sm:$0xff]
        %v213 = vld [vmem:[%s185] sm:$0xff]
        %v214 = vxor.u32 %v212, 2147483648
        %v215 = vmul.f32 %v214, 1.442695
        %v216 = vpow.pop %v215
        %v217 = vadd.f32 %v216, 1.0
        %v218 = vrcp.pop %v217
        %v219 = vmul.f32 1.0, %v218
        %vm220 = vcmp.ne.f32.partialorder %v213, -1.0
        %v221 = vsel %vm220, %v219, 0.0
        %v222 = vmul.f32 %v221, %v213
        %v223 = vmax.f32 %v221, %v213
        %224 = vadd.xlane.f32.xlu0 %v222
        %v225 = vpop.xlane.xlu0 %224
        %v226 = vrot.slane %v225, 4
        %v227 = vadd.f32 %v225, %v226
        %v228 = vrot.slane %v227, 2
        %v229 = vadd.f32 %v227, %v228
        %v230 = vrot.slane %v229, 1
        %v231 = vadd.f32 %v229, %v230
        %s232 = vtos %v231
        %233 = vadd.xlane.f32.xlu0 %v223
        %v234 = vpop.xlane.xlu0 %233
        %v235 = vrot.slane %v234, 4
        %v236 = vadd.f32 %v234, %v235
        %v237 = vrot.slane %v236, 2
        %v238 = vadd.f32 %v236, %v237
        %v239 = vrot.slane %v238, 1
        %v240 = vadd.f32 %v238, %v239
        %s241 = vtos %v240
        %s242 = sadd.f32 %s241, 1e-08
        %v243 = vstv %s242
        %v244 = vrcp.pop %v243
        %s245 = vtos %v244
        %s246 = smul.f32 %s232, %s245
        %s247 = ssub.f32 1.0, %s246
        %v248 = vstv %s247
        %vm249 = vcmask 0
        %250 = vst.msk [vmem:[%s211] sm:$0x1] %vm249, %v248
        %p251 = scmp.lt.s32.totalorder %s23, 1
        %s252 = scalar_select %p251, %s23, 1
        %s253 = scalar_lea.vmem %s2, %s252
        // Predicated region
        $region37: #{tpu_custom_call.1} parent=27 // pred_check
          %p254 = pneg %p105
        $region38: #{tpu_custom_call.1} parent=27 // pred_check_branch
          %256 = sbr.rel (%p254) target = $region40
        $region39: #{tpu_custom_call.1} parent=27 // pred_region
          _
        $region40: #{tpu_custom_call.1} parent=27 // pred_fallthru
          _
      $region28: #{tpu_custom_call.1} parent=5 // pred_fallthru
        _
      %p257 = scmp.le.s32.totalorder 2, %s14
      // Predicated region
      $region41: #{tpu_custom_call.1} parent=5 // pred_check
        %p258 = pneg %p257
      $region42: #{tpu_custom_call.1} parent=5 // pred_check_branch
        %260 = sbr.rel (%p258) target = $region44
      $region43: #{tpu_custom_call.1} parent=5 // pred_region
        %s261 = ssub.s32 %s14, 2
        // Predicated region
        $region45: #{tpu_custom_call.1} parent=43 // pred_check
          %p262 = pneg %p111
        $region46: #{tpu_custom_call.1} parent=43 // pred_check_branch
          %264 = sbr.rel (%p262) target = $region48
        $region47: #{tpu_custom_call.1} parent=43 // pred_region
          %p265 = scmp.lt.s32.totalorder %s25, 1
          %s266 = scalar_select %p265, %s25, 1
          %s267 = scalar_lea.vmem %s2, %s266
        $region48: #{tpu_custom_call.1} parent=43 // pred_fallthru
          _
      $region44: #{tpu_custom_call.1} parent=5 // pred_fallthru
        _
    $region6: #{tpu_custom_call.1} parent=1 // loop_footer
      %s18 = sadd.s32 1, %s14
    $region7: #{tpu_custom_call.1} parent=1 // loop_footer_branch
      %13 = sbr.rel target = $region3
    $region8: #{tpu_custom_call.1} parent=1 // loop_exit
      _
    %268 = vsyncpa [#allocation5], 1
    %s269 = scalar_lea.sflag [#allocation5], 1
    %270 = vsyncpa %s269, 1
    %271 = vsyncpa [#allocation7], 1
    %s272 = scalar_lea.sflag [#allocation7], 1
    %273 = vsyncpa %s272, 1

</llo_original>
